<compile_context>
chip_gen: v5e
topology: v5e:2x2
jax: 0.10.0
libtpu: 0.0.40
codegen_flags: <defaults>
</compile_context>

<pallas_src>
import functools

import jax
import jax.numpy as jnp
from jax.experimental import pallas as pl
from jax.experimental.pallas import tpu as pltpu


def _wce_kernel(pred_ref, tgt_ref, w_ref, out_ref, acc_ref, *,
                ignore_index, hw, tile_px, tiles_per_split, mask_tail):
    i = pl.program_id(2)

    @pl.when(i == 0)
    def _():
        acc_ref[...] = jnp.zeros_like(acc_ref)

    logits = pred_ref[...].astype(jnp.float32)           # (C, T)
    tgt = tgt_ref[...].astype(jnp.int32)                 # (1, T)
    w = w_ref[...]                                        # (C, 1) f32

    valid = tgt != ignore_index                           # (1, T) bool
    if mask_tail:
        # Uneven last tile: mask out-of-bounds pixels and sanitize their
        # (undefined) logits so exp/log stay finite (NaN * 0 = NaN would
        # otherwise poison the accumulator).
        base = (pl.program_id(0) * tiles_per_split + i) * tile_px
        pix = base + jax.lax.broadcasted_iota(jnp.int32, tgt.shape, 1)
        in_bounds = pix < hw
        valid = jnp.logical_and(valid, in_bounds)
        logits = jnp.where(in_bounds, logits, jnp.float32(0.0))

    # Numerically stable log-sum-exp over the class (sublane) axis.
    m = jnp.max(logits, axis=0, keepdims=True)            # (1, T)
    z = logits - m                                        # (C, T)
    lse = jnp.log(jnp.sum(jnp.exp(z), axis=0, keepdims=True))   # (1, T)

    # One-hot gather of z[target] and weight[target]; do NOT materialize full
    # logp = z - lse or logp * onehot over (C, T) (VALU-slot trimming).
    cls = jax.lax.broadcasted_iota(jnp.int32, logits.shape, 0)   # (C, T)
    onehot = cls == tgt                                          # (C, T)
    z_t = jnp.sum(jnp.where(onehot, z, jnp.float32(0.0)),
                  axis=0, keepdims=True)                         # (1, T)
    w_t = jnp.sum(jnp.where(onehot, w, jnp.float32(0.0)),
                  axis=0, keepdims=True)                         # (1, T)

    wv = w_t * valid.astype(jnp.float32)                  # per-pixel weight
    # Lane-wide accumulation: sublane 0 = weighted NLL, sublane 1 = weight.
    acc_ref[...] += jnp.concatenate([wv * (lse - z_t), wv], axis=0)   # (2, T)

    # Single cross-lane reduction per (split, batch) -> tiny output block.
    @pl.when(i == pl.num_programs(2) - 1)
    def _():
        out_ref[...] = jnp.sum(acc_ref[...], axis=1, keepdims=True)   # (2, 1)


def _vmem_budget():
    """Returns (vmem_limit_bytes, tile_budget_bytes), TPU-generation aware."""
    try:
        cap = int(pltpu.get_tpu_info().vmem_capacity_bytes)
    except Exception:  # conservative fallback if the query is unavailable
        cap = 64 << 20
    if cap >= (128 << 20):            # v5e / v6e: 128 MiB physical VMEM
        return 96 << 20, 40 << 20
    # v7x-like: 64 MiB physical per core -> keep total working set <= ~48 MiB.
    limit = max(32 << 20, cap - (16 << 20))
    budget = max(12 << 20, cap // 2 - (8 << 20))
    return limit, budget


def _choose_tile(hw, max_px):
    """Pick a pixel-tile width (multiple of 128).  Prefer a divisor of hw so
    no pred pad-copy and no in-kernel tail masking are needed."""
    max_px = max(128, (max_px // 128) * 128)
    u_tile = min(max_px, pl.cdiv(hw, 128) * 128)   # uneven-tail fallback tile
    best_div = 0
    if hw % 128 == 0:
        n128 = hw // 128
        for d in range(min(n128, max_px // 128), 0, -1):
            if n128 % d == 0:
                best_div = d * 128
                break
    if best_div > 0 and best_div * 2 >= u_tile:
        return best_div, False                      # divides evenly
    return u_tile, (hw % u_tile != 0)               # mask the tail in-kernel


def weighted_cross_entropy_loss(pred, target, weights=None, ignore_index=None,
                                tile_px=None):
    """pred: (N, C, H, W) float, target: (N, H, W) int. Returns scalar loss."""
    N, C, H, W = pred.shape
    ign = int(ignore_index) if ignore_index is not None else -100
    HW = H * W

    # Free reshapes: no transpose, no pad, no pred dtype cast (the kernel
    # upcasts per tile, so bf16 pred halves the dominant HBM stream).
    x = pred.reshape(N, C, HW)
    if target.dtype in (jnp.int8, jnp.int16, jnp.int32, jnp.uint8):
        t = target.reshape(N, 1, HW)          # keep narrow targets narrow
    else:
        t = target.reshape(N, 1, HW).astype(jnp.int32)

    if weights is None:
        w = jnp.ones((C, 1), jnp.float32)
    else:
        w = jnp.asarray(weights, jnp.float32).reshape(C, 1)

    vmem_limit, tile_budget = _vmem_budget()
    pred_isz = jnp.dtype(x.dtype).itemsize
    tgt_isz = jnp.dtype(t.dtype).itemsize
    # Per-pixel VMEM bytes: double-buffered pred + target tiles, the resident
    # (2, T) f32 accumulator, and an allowance for in-kernel (C, T) temps.
    per_px = 2 * C * pred_isz + 2 * tgt_isz + 8 + 8 * C * 4 + 16
    max_px = max(128, min(65536, tile_budget // per_px))

    if tile_px is None:
        tile_px, mask_tail = _choose_tile(HW, max_px)
    else:
        tile_px = max(128, (int(tile_px) // 128) * 128)
        mask_tail = (HW % tile_px != 0)

    n_tiles = pl.cdiv(HW, tile_px)
    # Split the pixel axis across two resident accumulators so both v7x
    # TensorCores stay busy even at N == 1 (harmless on v5e/v6e).
    S = 2 if (n_tiles >= 2 and n_tiles % 2 == 0) else 1
    tps = n_tiles // S

    kernel = functools.partial(
        _wce_kernel, ignore_index=ign, hw=HW, tile_px=tile_px,
        tiles_per_split=tps, mask_tail=mask_tail)

    cost = pl.CostEstimate(
        flops=12 * N * C * HW,
        transcendentals=N * (C + 1) * HW,
        bytes_accessed=N * C * HW * pred_isz + N * HW * tgt_isz + C * 4,
    )

    out = pl.pallas_call(
        kernel,
        out_shape=jax.ShapeDtypeStruct((S, N, 2, 1), jnp.float32),
        grid_spec=pltpu.PrefetchScalarGridSpec(
            num_scalar_prefetch=0,
            grid=(S, N, tps),
            in_specs=[
                pl.BlockSpec((None, C, tile_px),
                             lambda s, n, i: (n, 0, s * tps + i)),   # pred
                pl.BlockSpec((None, 1, tile_px),
                             lambda s, n, i: (n, 0, s * tps + i)),   # target
                pl.BlockSpec((C, 1), lambda s, n, i: (0, 0)),        # weights
            ],
            out_specs=pl.BlockSpec((None, None, 2, 1),
                                   lambda s, n, i: (s, n, 0, 0)),
            scratch_shapes=[pltpu.VMEM((2, tile_px), jnp.float32)],
        ),
        compiler_params=pltpu.CompilerParams(
            dimension_semantics=("parallel", "parallel", "arbitrary"),
            vmem_limit_bytes=int(vmem_limit)),
        cost_estimate=cost,
    )(x, t, w)

    # Tiny final reduction over (split, batch): (S, N, 2, 1) -> (2,).
    sums = jnp.sum(out, axis=(0, 1, 3))
    return sums[0] / sums[1]


def _reference_loss(pred, target, weights, ignore_index):
    """Pure-JAX reference mirroring F.cross_entropy semantics."""
    N, C, H, W = pred.shape
    x = jnp.transpose(pred, (0, 2, 3, 1)).reshape(-1, C).astype(jnp.float32)
    t = target.reshape(-1).astype(jnp.int32)
    logp = jax.nn.log_softmax(x, axis=-1)
    valid = (t != ignore_index)
    t_safe = jnp.where(valid, t, 0)
    nll = -jnp.take_along_axis(logp, t_safe[:, None], axis=-1)[:, 0]
    w_pix = weights[t_safe] * valid.astype(jnp.float32)
    return jnp.sum(nll * w_pix) / jnp.sum(w_pix)


if __name__ == "__main__":
    key = jax.random.PRNGKey(0)
    k1, k2, k3, k4 = jax.random.split(key, 4)

    N, C, H, W = 2, 4, 16, 16
    ignore_index = 255

    pred = jax.random.normal(k1, (N, C, H, W), dtype=jnp.float32)
    target = jax.random.randint(k2, (N, H, W), 0, C, dtype=jnp.int32)
    # mark a few pixels as ignored to exercise ignore_index handling
    ign_mask = jax.random.bernoulli(k3, 0.1, (N, H, W))
    target = jnp.where(ign_mask, ignore_index, target)
    # deterministic positive class weights
    weights = jax.random.uniform(k4, (C,), dtype=jnp.float32,
                                 minval=0.5, maxval=1.5)

    loss = weighted_cross_entropy_loss(pred, target, weights=weights,
                                       ignore_index=ignore_index)
    loss = jax.block_until_ready(loss)

    ref = _reference_loss(pred, target, weights, ignore_index)
    assert jnp.allclose(loss, ref, rtol=1e-5, atol=1e-5), (loss, ref)

    print("KERNEL_OK")
</pallas_src>

<mosaic_0001>
module attributes {stable_mosaic.version = 11 : i64} {
  func.func @_wce_kernel(%arg0: i32, %arg1: i32, %arg2: i32, %arg3: memref<1x4x256xf32, #tpu.memory_space<vmem>>, %arg4: memref<1x1x256xi32, #tpu.memory_space<vmem>>, %arg5: memref<4x1xf32, #tpu.memory_space<vmem>>, %arg6: memref<1x1x2x1xf32, #tpu.memory_space<vmem>>, %arg7: memref<2x256xf32, #tpu.memory_space<vmem>>) attributes {dimension_semantics = [#tpu.dimension_semantics<parallel>, #tpu.dimension_semantics<parallel>, #tpu.dimension_semantics<arbitrary>], iteration_bounds = array<i64: 1, 2, 1>, scalar_prefetch = 0 : i64, scratch_operands = 1 : i64, tpu.core_type = #tpu.core_type<tc>, window_params = [{transform_indices = @transform_0, window_bounds = array<i64: 1, 4, 256>}, {transform_indices = @transform_1, window_bounds = array<i64: 1, 1, 256>}, {pipeline_mode = #tpu.pipeline_mode<synchronous>, transform_indices = @transform_2, window_bounds = array<i64: 4, 1>}, {transform_indices = @transform_3, window_bounds = array<i64: 1, 1, 2, 1>}]} {
    %c0_i32 = arith.constant 0 : i32
    %0 = arith.cmpi eq, %arg2, %c0_i32 : i32
    %1 = arith.extui %0 : i1 to i32
    %c0_i32_0 = arith.constant 0 : i32
    %2 = arith.cmpi ne, %1, %c0_i32_0 : i32
    scf.if %2 {
      %cst_19 = arith.constant 0.000000e+00 : f32
      %43 = vector.broadcast %cst_19 : f32 to vector<2x256xf32>
      %c0_20 = arith.constant 0 : index
      %c0_21 = arith.constant 0 : index
      %44 = vector.load %arg7[%c0_20, %c0_21] : memref<2x256xf32, #tpu.memory_space<vmem>>, vector<2x256xf32>
      tpu.vector_store %arg7[%c0_20, %c0_21], %43 {strides = array<i32>} : memref<2x256xf32, #tpu.memory_space<vmem>>, vector<2x256xf32>,
    } else {
    }
    %c0 = arith.constant 0 : index
    %c0_1 = arith.constant 0 : index
    %c0_2 = arith.constant 0 : index
    %3 = vector.load %arg3[%c0, %c0_1, %c0_2] : memref<1x4x256xf32, #tpu.memory_space<vmem>>, vector<1x4x256xf32>
    %4 = vector.shape_cast %3 : vector<1x4x256xf32> to vector<4x256xf32>
    %c0_3 = arith.constant 0 : index
    %c0_4 = arith.constant 0 : index
    %c0_5 = arith.constant 0 : index
    %5 = vector.load %arg4[%c0_3, %c0_4, %c0_5] : memref<1x1x256xi32, #tpu.memory_space<vmem>>, vector<1x1x256xi32>
    %6 = vector.shape_cast %5 : vector<1x1x256xi32> to vector<1x256xi32>
    %c0_6 = arith.constant 0 : index
    %c0_7 = arith.constant 0 : index
    %7 = vector.load %arg5[%c0_6, %c0_7] : memref<4x1xf32, #tpu.memory_space<vmem>>, vector<4x1xf32>
    %c255_i32 = arith.constant 255 : i32
    %8 = vector.broadcast %c255_i32 : i32 to vector<1x256xi32>
    %9 = arith.cmpi ne, %6, %8 : vector<1x256xi32>
    %cst = arith.constant dense<0xFF800000> : vector<256xf32>
    %10 = vector.multi_reduction <maximumf>, %4, %cst [0] : vector<4x256xf32> to vector<256xf32>
    %11 = vector.shape_cast %10 : vector<256xf32> to vector<1x256xf32>
    %12 = vector.broadcast %11 : vector<1x256xf32> to vector<4x256xf32>
    %13 = arith.subf %4, %12 : vector<4x256xf32>
    %14 = math.exp %13 : vector<4x256xf32>
    %cst_8 = arith.constant dense<0.000000e+00> : vector<256xf32>
    %15 = vector.multi_reduction <add>, %14, %cst_8 [0] : vector<4x256xf32> to vector<256xf32>
    %16 = vector.shape_cast %15 : vector<256xf32> to vector<1x256xf32>
    %17 = math.log %16 : vector<1x256xf32>
    %18 = tpu.iota {dimensions = array<i32: 0>} : vector<4x256xi32>
    %19 = vector.broadcast %6 : vector<1x256xi32> to vector<4x256xi32>
    %20 = arith.cmpi eq, %18, %19 : vector<4x256xi32>
    %cst_9 = arith.constant 0.000000e+00 : f32
    %21 = vector.broadcast %cst_9 : f32 to vector<4x256xf32>
    %22 = arith.select %20, %13, %21 : vector<4x256xi1>, vector<4x256xf32>
    %cst_10 = arith.constant dense<0.000000e+00> : vector<256xf32>
    %23 = vector.multi_reduction <add>, %22, %cst_10 [0] : vector<4x256xf32> to vector<256xf32>
    %24 = vector.shape_cast %23 : vector<256xf32> to vector<1x256xf32>
    %cst_11 = arith.constant 0.000000e+00 : f32
    %25 = vector.shape_cast %7 : vector<4x1xf32> to vector<4x1xf32>
    %26 = vector.broadcast %25 : vector<4x1xf32> to vector<4x256xf32>
    %27 = vector.broadcast %cst_11 : f32 to vector<4x256xf32>
    %28 = arith.select %20, %26, %27 : vector<4x256xi1>, vector<4x256xf32>
    %cst_12 = arith.constant dense<0.000000e+00> : vector<256xf32>
    %29 = vector.multi_reduction <add>, %28, %cst_12 [0] : vector<4x256xf32> to vector<256xf32>
    %30 = vector.shape_cast %29 : vector<256xf32> to vector<1x256xf32>
    %31 = arith.extui %9 : vector<1x256xi1> to vector<1x256xi32>
    %32 = arith.sitofp %31 : vector<1x256xi32> to vector<1x256xf32>
    %33 = arith.mulf %30, %32 : vector<1x256xf32>
    %c0_13 = arith.constant 0 : index
    %c0_14 = arith.constant 0 : index
    %34 = vector.load %arg7[%c0_13, %c0_14] : memref<2x256xf32, #tpu.memory_space<vmem>>, vector<2x256xf32>
    %35 = arith.subf %17, %24 : vector<1x256xf32>
    %36 = arith.mulf %33, %35 : vector<1x256xf32>
    %37 = tpu.concatenate %36, %33 in 0 : vector<1x256xf32>, vector<1x256xf32> -> vector<2x256xf32>
    %38 = arith.addf %34, %37 : vector<2x256xf32>
    %c0_15 = arith.constant 0 : index
    %c0_16 = arith.constant 0 : index
    %39 = vector.load %arg7[%c0_15, %c0_16] : memref<2x256xf32, #tpu.memory_space<vmem>>, vector<2x256xf32>
    tpu.vector_store %arg7[%c0_15, %c0_16], %38 {strides = array<i32>} : memref<2x256xf32, #tpu.memory_space<vmem>>, vector<2x256xf32>,
    %c0_i32_17 = arith.constant 0 : i32
    %40 = arith.cmpi eq, %arg2, %c0_i32_17 : i32
    %41 = arith.extui %40 : i1 to i32
    %c0_i32_18 = arith.constant 0 : i32
    %42 = arith.cmpi ne, %41, %c0_i32_18 : i32
    scf.if %42 {
      %c0_19 = arith.constant 0 : index
      %c0_20 = arith.constant 0 : index
      %43 = vector.load %arg7[%c0_19, %c0_20] : memref<2x256xf32, #tpu.memory_space<vmem>>, vector<2x256xf32>
      %cst_21 = arith.constant dense<0.000000e+00> : vector<2xf32>
      %44 = vector.multi_reduction <add>, %43, %cst_21 [1] : vector<2x256xf32> to vector<2xf32>
      %45 = vector.shape_cast %44 : vector<2xf32> to vector<2x1xf32>
      %c0_22 = arith.constant 0 : index
      %c0_23 = arith.constant 0 : index
      %c0_24 = arith.constant 0 : index
      %c0_25 = arith.constant 0 : index
      %46 = vector.load %arg6[%c0_22, %c0_23, %c0_24, %c0_25] : memref<1x1x2x1xf32, #tpu.memory_space<vmem>>, vector<1x1x2x1xf32>
      %47 = vector.shape_cast %46 : vector<1x1x2x1xf32> to vector<2x1xf32>
      %48 = vector.shape_cast %45 : vector<2x1xf32> to vector<1x1x2x1xf32>
      tpu.vector_store %arg6[%c0_22, %c0_23, %c0_24, %c0_25], %48 {strides = array<i32>} : memref<1x1x2x1xf32, #tpu.memory_space<vmem>>, vector<1x1x2x1xf32>,
    } else {
    }
    return
  }
  func.func @transform_0(%arg0: i32, %arg1: i32, %arg2: i32) -> (i32, i32, i32) {
    %c1_i32 = arith.constant 1 : i32
    %0 = arith.muli %arg0, %c1_i32 : i32
    %1 = arith.addi %0, %arg2 : i32
    %c0_i32 = arith.constant 0 : i32
    %c0_i32_0 = arith.constant 0 : i32
    return %arg1, %c0_i32, %1 : i32, i32, i32
  }
  func.func @transform_1(%arg0: i32, %arg1: i32, %arg2: i32) -> (i32, i32, i32) {
    %c1_i32 = arith.constant 1 : i32
    %0 = arith.muli %arg0, %c1_i32 : i32
    %1 = arith.addi %0, %arg2 : i32
    %c0_i32 = arith.constant 0 : i32
    %c0_i32_0 = arith.constant 0 : i32
    return %arg1, %c0_i32, %1 : i32, i32, i32
  }
  func.func @transform_2(%arg0: i32, %arg1: i32, %arg2: i32) -> (i32, i32) {
    %c0_i32 = arith.constant 0 : i32
    %c0_i32_0 = arith.constant 0 : i32
    %c0_i32_1 = arith.constant 0 : i32
    return %c0_i32, %c0_i32_0 : i32, i32
  }
  func.func @transform_3(%arg0: i32, %arg1: i32, %arg2: i32) -> (i32, i32, i32, i32) {
    %c0_i32 = arith.constant 0 : i32
    %c0_i32_0 = arith.constant 0 : i32
    %c0_i32_1 = arith.constant 0 : i32
    return %arg0, %arg1, %c0_i32, %c0_i32_0 : i32, i32, i32, i32
  }
}

</mosaic_0001>

<llo_original>
// kernel: tpu_custom_call.1
$region0: #{tpu_custom_call.1}
  #allocation0 [shape = 'u32[]', space=smem, size = 0x4, offset = 0x4, fixed_abs, tag = 'smem constant byte address 0x4 - core index']
  #allocation1 [shape = 'u32[72,128]{1,0:T(1,128)}', space=vmem, size = 0x9000, scoped, tag = 'internal scratch']
  #allocation2 [shape = 'f32[2,256]{1,0:T(2,128)}', space=vmem, size = 0x800, scoped, tag = 'scratch operand']
  %s0 = inlined_call_operand.hbm [shape: f32[2,4,256], index: 0, kind: input, shape index: {}]
  %s1 = inlined_call_operand.vmem [shape: s32[2,1,256], index: 1, kind: input, shape index: {}]
  %s2 = inlined_call_operand.vmem [shape: f32[4,1], index: 2, kind: input, shape index: {}]
  %s3 = inlined_call_operand.vmem [shape: f32[1,2,2,1], index: 3, kind: output, shape index: {}]
  %s4 = sld [smem:[#allocation0]]
  $region57: #{tpu_custom_call.1} parent=0
    _
  %s6 = ssub.s32 1, %s4
  %s7 = scalar_select 0, %s6, %s4
  $region1: #{tpu_custom_call.1} parent=0
    #allocation3 [shape = 'u8[8192]{0}', space=vmem, size = 0x2000, scoped, tag = 'input window, operand 0']
    #allocation4 [shape = 's32[2]{0}', space=sflag, size = 0x8, scoped, tag = 'scoped memory for tpu_custom_call.1']
    %8 = vsyncpa [#allocation4], 0
    %s9 = scalar_lea.sflag [#allocation4], 1
    %10 = vsyncpa %s9, 0
    loop: start=0, step=1, limit=4
    $region2: #{tpu_custom_call.1} parent=1 // loop_pre_header
      _
    $region3: #{tpu_custom_call.1} parent=1 // loop_header
      %s12 = sphi 0, %s16
      %p13 = scmp.ge.s32.totalorder %s12, 4
      %s19 = sphi 0, %s38
      %s20 = sphi 0, %s34
      %s21 = sphi 0, %s30
      %s22 = sphi 0, %s19
      %s23 = sphi 0, %s20
      %s24 = sphi 0, %s21
      %s25 = sphi 0, %s22
      %s26 = sphi 0, %s23
      %s27 = sphi 0, %s24
      %s45 = sphi 0, %s47
      %s48 = sphi 0, %s45
      %s49 = sphi 0, %s48
      %s65 = sphi 0, %s49
      %s75 = sphi 0, %s77
      %s78 = sphi 0, %s75
      %s79 = sphi 0, %s78
      %s95 = sphi 0, %s79
      %s99 = sphi 0, %s99
      %s101 = sphi 0, %s99
      %s102 = sphi 0, %s101
      %s116 = sphi 0, %s102
      %s124 = sphi 0, %s126
      %s127 = sphi 0, %s124
      %s128 = sphi 0, %s127
      %s144 = sphi 0, %s128
    $region4: #{tpu_custom_call.1} parent=1 // loop_header_branch
      %15 = sbr.rel (%p13) target = $region8
    $region5: #{tpu_custom_call.1} parent=1 // loop_body
      %s17 = ssub.s32 %s12, 1
      %s18 = ssub.s32 %s12, 2
      %s28 = sadd.s32 1, %s21
      %p29 = scmp.ge.s32.totalorder %s28, 1
      %s30 = scalar_select %p29, 0, %s28
      %s31 = sadd.s32 1, %s20
      %s32 = scalar_select %p29, %s31, %s20
      %p33 = scmp.ge.s32.totalorder %s32, 2
      %s34 = scalar_select %p33, 0, %s32
      %s35 = sadd.s32 1, %s19
      %s36 = scalar_select %p33, %s35, %s19
      %p37 = scmp.ge.s32.totalorder %s36, 1
      %s38 = scalar_select %p37, 0, %s36
      %s39 = sadd.s32 %s19, %s21
      %s40 = sadd.s32 %s38, %s30
      %s41 = ssub.s32 %s20, %s34
      %s42 = ssub.s32 %s39, %s40
      %s43 = sor.u32 %s41, %s42
      %p44 = scmp.eq.s32.totalorder %s43, 0
      %s46 = sadd.s32 %s45, 1
      %s47 = scalar_select %p44, %s45, %s46
      %p50 = pneg %p44
      %p51 = scmp.eq.s32.totalorder %s12, 1
      %p52 = por %p50, %p51
      %p53 = scmp.ne.s32.totalorder %s45, %s48
      %p54 = scmp.eq.s32.totalorder %s12, 0
      %p55 = por %p53, %p54
      %p56 = scmp.ne.s32.totalorder %s45, %s48
      %p57 = scmp.eq.s32.totalorder %s17, 1
      %p58 = por %p56, %p57
      %p59 = scmp.ne.s32.totalorder %s48, %s49
      %p60 = scmp.eq.s32.totalorder %s17, 0
      %p61 = por %p59, %p60
      %p62 = scmp.ne.s32.totalorder %s48, %s49
      %p63 = scmp.eq.s32.totalorder %s18, 1
      %p64 = por %p62, %p63
      %p66 = scmp.ne.s32.totalorder %s49, %s65
      %p67 = scmp.eq.s32.totalorder %s18, 0
      %p68 = por %p66, %p67
      %s69 = sadd.s32 %s19, %s21
      %s70 = sadd.s32 %s38, %s30
      %s71 = ssub.s32 %s20, %s34
      %s72 = ssub.s32 %s69, %s70
      %s73 = sor.u32 %s71, %s72
      %p74 = scmp.eq.s32.totalorder %s73, 0
      %s76 = sadd.s32 %s75, 1
      %s77 = scalar_select %p74, %s75, %s76
      %p80 = pneg %p74
      %p81 = scmp.eq.s32.totalorder %s12, 1
      %p82 = por %p80, %p81
      %p83 = scmp.ne.s32.totalorder %s75, %s78
      %p84 = scmp.eq.s32.totalorder %s12, 0
      %p85 = por %p83, %p84
      %p86 = scmp.ne.s32.totalorder %s75, %s78
      %p87 = scmp.eq.s32.totalorder %s17, 1
      %p88 = por %p86, %p87
      %p89 = scmp.ne.s32.totalorder %s78, %s79
      %p90 = scmp.eq.s32.totalorder %s17, 0
      %p91 = por %p89, %p90
      %p92 = scmp.ne.s32.totalorder %s78, %s79
      %p93 = scmp.eq.s32.totalorder %s18, 1
      %p94 = por %p92, %p93
      %p96 = scmp.ne.s32.totalorder %s79, %s95
      %p97 = scmp.eq.s32.totalorder %s18, 0
      %p98 = por %p96, %p97
      %s100 = sadd.s32 %s99, 1
      %p103 = scmp.eq.s32.totalorder %s12, 1
      %p104 = scmp.ne.s32.totalorder %s99, %s101
      %p105 = scmp.eq.s32.totalorder %s12, 0
      %p106 = por %p104, %p105
      %p107 = scmp.ne.s32.totalorder %s99, %s101
      %p108 = scmp.eq.s32.totalorder %s17, 1
      %p109 = por %p107, %p108
      %p110 = scmp.ne.s32.totalorder %s101, %s102
      %p111 = scmp.eq.s32.totalorder %s17, 0
      %p112 = por %p110, %p111
      %p113 = scmp.ne.s32.totalorder %s101, %s102
      %p114 = scmp.eq.s32.totalorder %s18, 1
      %p115 = por %p113, %p114
      %p117 = scmp.ne.s32.totalorder %s102, %s116
      %p118 = scmp.eq.s32.totalorder %s18, 0
      %p119 = por %p117, %p118
      %s120 = ssub.s32 %s19, %s38
      %s121 = ssub.s32 %s20, %s34
      %s122 = sor.u32 %s120, %s121
      %p123 = scmp.eq.s32.totalorder %s122, 0
      %s125 = sadd.s32 %s124, 1
      %s126 = scalar_select %p123, %s124, %s125
      %p129 = pneg %p123
      %p130 = scmp.eq.s32.totalorder %s12, 1
      %p131 = por %p129, %p130
      %p132 = scmp.ne.s32.totalorder %s124, %s127
      %p133 = scmp.eq.s32.totalorder %s12, 0
      %p134 = por %p132, %p133
      %p135 = scmp.ne.s32.totalorder %s124, %s127
      %p136 = scmp.eq.s32.totalorder %s17, 1
      %p137 = por %p135, %p136
      %p138 = scmp.ne.s32.totalorder %s127, %s128
      %p139 = scmp.eq.s32.totalorder %s17, 0
      %p140 = por %p138, %p139
      %p141 = scmp.ne.s32.totalorder %s127, %s128
      %p142 = scmp.eq.s32.totalorder %s18, 1
      %p143 = por %p141, %p142
      %p145 = scmp.ne.s32.totalorder %s128, %s144
      %p146 = scmp.eq.s32.totalorder %s18, 0
      %p147 = por %p145, %p146
      %p148 = scmp.le.s32.totalorder 1, %s12
      %p149 = scmp.lt.s32.totalorder %s12, 3
      %p150 = pnand %p148, %p149
      %p151 = pneg %p150
      // Predicated region
      $region9: #{tpu_custom_call.1} parent=5 // pred_check
        _
      $region10: #{tpu_custom_call.1} parent=5 // pred_check_branch
        %153 = sbr.rel (%p150) target = $region12
      $region11: #{tpu_custom_call.1} parent=5 // pred_region
        %s154 = ssub.s32 %s12, 1
        // Predicated region
        $region13: #{tpu_custom_call.1} parent=11 // pred_check
          %p155 = pneg %p112
        $region14: #{tpu_custom_call.1} parent=11 // pred_check_branch
          %157 = sbr.rel (%p155) target = $region16
        $region15: #{tpu_custom_call.1} parent=11 // pred_region
          _
        $region16: #{tpu_custom_call.1} parent=11 // pred_fallthru
          _
      $region12: #{tpu_custom_call.1} parent=5 // pred_fallthru
        _
      %p158 = scmp.lt.s32.totalorder %s12, 2
      // Predicated region
      $region17: #{tpu_custom_call.1} parent=5 // pred_check
        %p159 = pneg %p158
      $region18: #{tpu_custom_call.1} parent=5 // pred_check_branch
        %161 = sbr.rel (%p159) target = $region20
      $region19: #{tpu_custom_call.1} parent=5 // pred_region
        // Predicated region
        $region21: #{tpu_custom_call.1} parent=19 // pred_check
          %p162 = pneg %p55
        $region22: #{tpu_custom_call.1} parent=19 // pred_check_branch
          %164 = sbr.rel (%p162) target = $region24
        $region23: #{tpu_custom_call.1} parent=19 // pred_region
          %s165 = sand.u32 %s45, 1
          %s166 = scalar_lea.sflag [#allocation4], %s165
          %s167 = sand.u32 %s45, 1
          %s168 = smul.addr %s167, 8
          %s169 = scalar_lea.vmem [#allocation3], %s168
          %s170 = sadd.s32 %s19, %s21
          %s171 = smul.u32 2, %s170
          %173 = vsyncadd %s166, 0
          %s174 = smul.addr %s20, 2
          %s175 = sadd.s32 %s171, %s174
          %s176 = smul.addr %s175, 4
          %s177 = scalar_lea.hbm %s0, %s176
          %s179 = sshll.u32 %s177, 4
          %s180 = int_to_ptr.hbm [resolvable:$true] %s179
          %s181 = sshll.u32 %s169, 4
          %s182 = int_to_ptr.vmem [resolvable:$true] %s181
          %184 = dma.hbm_to_vmem [thread:$0]  %s180, 128, %s182, %s166
        $region24: #{tpu_custom_call.1} parent=19 // pred_fallthru
          _
        // Predicated region
        $region25: #{tpu_custom_call.1} parent=19 // pred_check
          %p185 = pneg %p85
        $region26: #{tpu_custom_call.1} parent=19 // pred_check_branch
          %187 = sbr.rel (%p185) target = $region28
        $region27: #{tpu_custom_call.1} parent=19 // pred_region
          %s188 = sadd.s32 %s19, %s21
          %s189 = smul.u32 2, %s188
          %p190 = scmp.lt.s32.totalorder %s20, 1
          %s191 = scalar_select %p190, %s20, 1
          %p192 = scmp.lt.s32.totalorder %s189, 1
          %s193 = scalar_select %p192, %s189, 1
          %s194 = smul.addr %s191, 2
          %s195 = sadd.s32 %s193, %s194
          %s196 = scalar_lea.vmem %s1, %s195
          %s197 = sadd.s32 %s19, %s21
          %s198 = smul.u32 2, %s197
        $region28: #{tpu_custom_call.1} parent=19 // pred_fallthru
          _
      $region20: #{tpu_custom_call.1} parent=5 // pred_fallthru
        _
      %p199 = scmp.le.s32.totalorder 1, %s12
      %p200 = scmp.lt.s32.totalorder %s12, 3
      %p201 = pnand %p199, %p200
      %p202 = pneg %p201
      // Predicated region
      $region29: #{tpu_custom_call.1} parent=5 // pred_check
        _
      $region30: #{tpu_custom_call.1} parent=5 // pred_check_branch
        %204 = sbr.rel (%p201) target = $region32
      $region31: #{tpu_custom_call.1} parent=5 // pred_region
        %s205 = ssub.s32 %s12, 1
        %s206 = sand.u32 %s48, 1
        %s207 = scalar_lea.sflag [#allocation4], %s206
        %s208 = sand.u32 %s48, 1
        %s209 = smul.addr %s208, 8
        %s210 = scalar_lea.vmem [#allocation3], %s209
        // Predicated region
        $region33: #{tpu_custom_call.1} parent=31 // pred_check
          %p211 = pneg %p61
        $region34: #{tpu_custom_call.1} parent=31 // pred_check_branch
          %213 = sbr.rel (%p211) target = $region36
        $region35: #{tpu_custom_call.1} parent=31 // pred_region
          %215 = dma.done %s207, 128
        $region36: #{tpu_custom_call.1} parent=31 // pred_fallthru
          _
        %s216 = sand.u32 %s48, 1
        %s217 = scalar_lea.sflag [#allocation4], %s216
        %s218 = sand.u32 %s48, 1
        %s219 = smul.addr %s218, 8
        %s220 = scalar_lea.vmem [#allocation3], %s219
        %p221 = pneg %p61
        %p222 = pneg %p58
        %s223 = sadd.s32 %s22, %s24
        %s224 = smul.u32 2, %s223
        %p225 = scmp.lt.s32.totalorder %s23, 1
        %s226 = scalar_select %p225, %s23, 1
        %p227 = scmp.lt.s32.totalorder %s224, 1
        %s228 = scalar_select %p227, %s224, 1
        %s229 = smul.addr %s226, 2
        %s230 = sadd.s32 %s228, %s229
        %s231 = scalar_lea.vmem %s1, %s230
        %p232 = pneg %p91
        %p233 = pneg %p88
        %p234 = pneg %p112
        %p235 = pneg %p109
        %p236 = pneg %p140
        %p237 = pneg %p137
        %p238 = scmp.lt.s32.totalorder %s22, 0
        %s239 = scalar_select %p238, %s22, 0
        %p240 = scmp.lt.s32.totalorder %s23, 1
        %s241 = scalar_select %p240, %s23, 1
        %s242 = smul.addr %s239, 2
        %s243 = sadd.s32 %s241, %s242
        %s244 = smul.addr %s243, 2
        %s245 = scalar_lea.vmem %s3, %s244
        %s246 = sadd.s32 %s22, %s24
        %s247 = smul.u32 2, %s246
        %s248 = sadd.s32 %s22, %s24
        %s249 = smul.u32 2, %s248
        %p250 = scmp.lt.s32.totalorder %s23, 1
        %s251 = scalar_select %p250, %s23, 1
        %p252 = scmp.lt.s32.totalorder %s249, 1
        %s253 = scalar_select %p252, %s249, 1
        %s254 = smul.addr %s251, 2
        %s255 = sadd.s32 %s253, %s254
        %s256 = scalar_lea.vmem %s1, %s255
        %s257 = sadd.s32 %s22, %s24
        %s258 = smul.u32 2, %s257
        %p259 = scmp.lt.s32.totalorder %s22, 0
        %s260 = scalar_select %p259, %s22, 0
        %p261 = scmp.lt.s32.totalorder %s23, 1
        %s262 = scalar_select %p261, %s23, 1
        %s263 = smul.addr %s260, 2
        %s264 = sadd.s32 %s262, %s263
        %s265 = smul.addr %s264, 2
        %s266 = scalar_lea.vmem %s3, %s265
        %p267 = scmp.eq.s32.totalorder %s24, 0
        // Predicated region
        $region37: #{tpu_custom_call.1} parent=31 // pred_check
          %p268 = pneg %p267
        $region38: #{tpu_custom_call.1} parent=31 // pred_check_branch
          %270 = sbr.rel (%p268) target = $region40
        $region39: #{tpu_custom_call.1} parent=31 // pred_region
          %271 = vst [vmem:[#allocation2] sm:$0xf] 0.0
        $region40: #{tpu_custom_call.1} parent=31 // pred_fallthru
          _
        %v272 = vld [vmem:[%s210] sm:$0xff]
        %v273 = vld [vmem:[%s256] sm:$0x3]
        %v274 = vld [vmem:[%s2] sm:$0xf]
        %vm275 = vcmp.ne.s32.totalorder %v273, 255
        %277 = vst [vmem:[#allocation1] ss:$2 sm:$0xff] %v272
        %v278 = vld.sshfl [vmem:[#allocation1] sm:$0xff pattern:$0x75316420]
        %v279 = vld.sshfl [vmem:[#allocation1 + $0x8] sm:$0xff pattern:$0x75316420]
        %vm282 = vcmask 1043456
        %v283 = vsel %vm282, %v278, -inf
        %v284 = vrot.slane %v283, 4
        %v285 = vmax.f32 %v283, %v284
        %v286 = vrot.slane %v285, 2
        %v287 = vmax.f32 %v285, %v286
        %v288 = vrot.slane %v287, 1
        %v289 = vmax.f32 %v287, %v288
        %v290 = vsel %vm282, %v279, -inf
        %v291 = vrot.slane %v290, 4
        %v292 = vmax.f32 %v290, %v291
        %v293 = vrot.slane %v292, 2
        %v294 = vmax.f32 %v292, %v293
        %v295 = vrot.slane %v294, 1
        %v296 = vmax.f32 %v294, %v295
        %v299 = vrot.slane %v296, 4
        %v300 = vsel %vm282, %v289, %v299
        %v302 = vsub.f32 %v272, %v300
        %v303 = vmul.f32 %v302, 1.442695
        %v304 = vpow.pop %v303
        %306 = vst [vmem:[#allocation1] ss:$2 sm:$0xff] %v304
        %v307 = vld.sshfl [vmem:[#allocation1] sm:$0xff pattern:$0x75316420]
        %v308 = vld.sshfl [vmem:[#allocation1 + $0x8] sm:$0xff pattern:$0x75316420]
        %v311 = vsel %vm282, %v307, 0.0
        %v312 = vrot.slane %v311, 4
        %v313 = vadd.f32 %v311, %v312
        %v314 = vrot.slane %v313, 2
        %v315 = vadd.f32 %v313, %v314
        %v316 = vrot.slane %v315, 1
        %v317 = vadd.f32 %v315, %v316
        %v318 = vsel %vm282, %v308, 0.0
        %v319 = vrot.slane %v318, 4
        %v320 = vadd.f32 %v318, %v319
        %v321 = vrot.slane %v320, 2
        %v322 = vadd.f32 %v320, %v321
        %v323 = vrot.slane %v322, 1
        %v324 = vadd.f32 %v322, %v323
        %v325 = vlog2.pop %v317
        %v326 = vmul.f32 %v325, 0.6931472
        %v327 = vlog2.pop %v324
        %v328 = vmul.f32 %v327, 0.6931472
        %v329 = vlaneseq
        %v330 = vshrl.u32 %v329, 7
        %v331 = vperm.slane %v273, 0
        %v332 = vperm.slane %v273, 1
        %vm333 = vcmp.eq.s32.totalorder %v330, %v331
        %vm334 = vcmp.eq.s32.totalorder %v330, %v332
        %336 = vst [vmem:[#allocation1] ss:$2 sm:$0xff] %v302
        %v337 = vld.sshfl [vmem:[#allocation1] sm:$0xff pattern:$0x75316420]
        %v338 = vld.sshfl [vmem:[#allocation1 + $0x8] sm:$0xff pattern:$0x75316420]
        %v341 = vsel %vm333, %v337, 0.0
        %v342 = vsel %vm334, %v338, 0.0
        %v343 = vsel %vm282, %v341, 0.0
        %v344 = vrot.slane %v343, 4
        %v345 = vadd.f32 %v343, %v344
        %v346 = vrot.slane %v345, 2
        %v347 = vadd.f32 %v345, %v346
        %v348 = vrot.slane %v347, 1
        %v349 = vadd.f32 %v347, %v348
        %v350 = vsel %vm282, %v342, 0.0
        %v351 = vrot.slane %v350, 4
        %v352 = vadd.f32 %v350, %v351
        %v353 = vrot.slane %v352, 2
        %v354 = vadd.f32 %v352, %v353
        %v355 = vrot.slane %v354, 1
        %v356 = vadd.f32 %v354, %v355
        %358 = vset.pattern.permute.xlu0 0
        %359 = vperm.xlu0 %358, %v274
        %v360 = vpop.permute.xlu0 %359
        %v362 = vsel %vm333, %v360, 0.0
        %v363 = vsel %vm334, %v360, 0.0
        %v364 = vsel %vm282, %v362, 0.0
        %v365 = vrot.slane %v364, 4
        %v366 = vadd.f32 %v364, %v365
        %v367 = vrot.slane %v366, 2
        %v368 = vadd.f32 %v366, %v367
        %v369 = vrot.slane %v368, 1
        %v370 = vadd.f32 %v368, %v369
        %v371 = vsel %vm282, %v363, 0.0
        %v372 = vrot.slane %v371, 4
        %v373 = vadd.f32 %v371, %v372
        %v374 = vrot.slane %v373, 2
        %v375 = vadd.f32 %v373, %v374
        %v376 = vrot.slane %v375, 1
        %v377 = vadd.f32 %v375, %v376
        %v378 = vsel %vm275, 1, 0
        %v379 = vcvt.s32.f32 %v378
        %v381 = vperm.slane %v379, 0
        %v382 = vperm.slane %v379, 1
        %v385 = vmul.f32 %v370, %v381
        %v386 = vmul.f32 %v377, %v382
        %v387 = vld [vmem:[#allocation2] sm:$0xf]
        %v388 = vsub.f32 %v326, %v349
        %v389 = vsub.f32 %v328, %v356
        %v390 = vmul.f32 %v385, %v388
        %v391 = vmul.f32 %v386, %v389
        %v394 = vrot.slane %v385, 7
        %v395 = vrot.slane %v386, 7
        %vm398 = vcmask 1040384
        %v399 = vsel %vm398, %v390, %v394
        %v400 = vsel %vm398, %v391, %v395
        %v403 = vrot.slane %v400, 6
        %vm404 = vcmask 1041408
        %v405 = vsel %vm404, %v399, %v403
        %v407 = vadd.f32 %v387, %v405
        %408 = vst [vmem:[#allocation2] sm:$0xf] %v407
        // Predicated region
        $region41: #{tpu_custom_call.1} parent=31 // pred_check
          %p409 = pneg %p267
        $region42: #{tpu_custom_call.1} parent=31 // pred_check_branch
          %411 = sbr.rel (%p409) target = $region44
        $region43: #{tpu_custom_call.1} parent=31 // pred_region
          %v412 = vld [vmem:[#allocation2] sm:$0xf]
          %414 = vst [vmem:[#allocation1] ss:$4 sm:$0xff] %v412
          %v415 = vld.sshfl [vmem:[#allocation1] sm:$0xff pattern:$0x73625140]
          %v416 = vld.sshfl [vmem:[#allocation1 + $0x8] sm:$0xff pattern:$0x73625140]
          %v419 = vsel %vm404, %v415, 0.0
          %v420 = vsel %vm404, %v416, 0.0
          %v421 = vadd.f32 %v419, %v420
          %422 = vadd.xlane.f32.xlu0 %v421
          %v423 = vpop.xlane.xlu0 %422
          %vm424 = vcmask 1024
          %425 = vst.msk [vmem:[%s266] sm:$0x3] %vm424, %v423
        $region44: #{tpu_custom_call.1} parent=31 // pred_fallthru
          _
        %p426 = scmp.lt.s32.totalorder %s22, 0
        %s427 = scalar_select %p426, %s22, 0
        %p428 = scmp.lt.s32.totalorder %s23, 1
        %s429 = scalar_select %p428, %s23, 1
        %s430 = smul.addr %s427, 2
        %s431 = sadd.s32 %s429, %s430
        %s432 = smul.addr %s431, 2
        %s433 = scalar_lea.vmem %s3, %s432
        // Predicated region
        $region45: #{tpu_custom_call.1} parent=31 // pred_check
          %p434 = pneg %p137
        $region46: #{tpu_custom_call.1} parent=31 // pred_check_branch
          %436 = sbr.rel (%p434) target = $region48
        $region47: #{tpu_custom_call.1} parent=31 // pred_region
          _
        $region48: #{tpu_custom_call.1} parent=31 // pred_fallthru
          _
      $region32: #{tpu_custom_call.1} parent=5 // pred_fallthru
        _
      %p437 = scmp.le.s32.totalorder 2, %s12
      // Predicated region
      $region49: #{tpu_custom_call.1} parent=5 // pred_check
        %p438 = pneg %p437
      $region50: #{tpu_custom_call.1} parent=5 // pred_check_branch
        %440 = sbr.rel (%p438) target = $region52
      $region51: #{tpu_custom_call.1} parent=5 // pred_region
        %s441 = ssub.s32 %s12, 2
        // Predicated region
        $region53: #{tpu_custom_call.1} parent=51 // pred_check
          %p442 = pneg %p143
        $region54: #{tpu_custom_call.1} parent=51 // pred_check_branch
          %444 = sbr.rel (%p442) target = $region56
        $region55: #{tpu_custom_call.1} parent=51 // pred_region
          %p445 = scmp.lt.s32.totalorder %s25, 0
          %s446 = scalar_select %p445, %s25, 0
          %p447 = scmp.lt.s32.totalorder %s26, 1
          %s448 = scalar_select %p447, %s26, 1
          %s449 = smul.addr %s446, 2
          %s450 = sadd.s32 %s448, %s449
          %s451 = smul.addr %s450, 2
          %s452 = scalar_lea.vmem %s3, %s451
        $region56: #{tpu_custom_call.1} parent=51 // pred_fallthru
          _
      $region52: #{tpu_custom_call.1} parent=5 // pred_fallthru
        _
    $region6: #{tpu_custom_call.1} parent=1 // loop_footer
      %s16 = sadd.s32 1, %s12
    $region7: #{tpu_custom_call.1} parent=1 // loop_footer_branch
      %11 = sbr.rel target = $region3
    $region8: #{tpu_custom_call.1} parent=1 // loop_exit
      _
    %453 = vsyncpa [#allocation4], 1
    %s454 = scalar_lea.sflag [#allocation4], 1
    %455 = vsyncpa %s454, 1

</llo_original>
